<compile_context>
chip_gen: v5e
topology: v5e:2x2
jax: 0.10.0
libtpu: 0.0.40
codegen_flags: <defaults>
</compile_context>

<pallas_src>
import jax
import jax.numpy as jnp
from jax.experimental import pallas as pl
from jax.experimental.pallas import tpu as pltpu


def _round_up(x: int, m: int) -> int:
    return (x + m - 1) // m * m


def head_kernel(x_ref, w1_ref, b1_ref, w2_ref, b2_ref, o_ref, acc_ref):
    k = pl.program_id(1)

    @pl.when(k == 0)
    def _():
        acc_ref[...] = jnp.zeros_like(acc_ref)

    # ---- Linear 1 partial product (MXU, bf16 in / f32 accumulate). BN(eval)
    # is already folded into w1/b1 by the wrapper. ----
    acc_ref[...] += jnp.dot(x_ref[...], w1_ref[...],
                            preferred_element_type=jnp.float32)

    @pl.when(k == pl.num_programs(1) - 1)
    def _():
        h = acc_ref[...] + b1_ref[...]            # bias (BN folded in)
        h = jnp.where(h >= 0.0, h, 0.01 * h)      # LeakyReLU, default slope
        # ---- Linear 2 (MXU) ----
        o = jnp.dot(h.astype(w2_ref.dtype), w2_ref[...],
                    preferred_element_type=jnp.float32)
        o_ref[...] = o + b2_ref[...]


def head_forward(x_nchw, params, *, k_tile=512):
    """x_nchw: [B, C, H, W] float32. Returns [B, n_classes] float32."""
    B = x_nchw.shape[0]
    # nn.Flatten() — plain-JAX glue outside the kernel.
    x = x_nchw.reshape(B, -1).astype(jnp.float32)
    K = x.shape[1]

    w1 = params["w1"]              # [in_features, out_channels]
    b1 = params["b1"].reshape(-1)  # [out_channels]
    w2 = params["w2"]              # [out_channels, n_classes]
    b2 = params["b2"].reshape(-1)  # [n_classes]
    eps = 1e-5

    # Fold BatchNorm1d (eval mode) into Linear1: affine-of-affine.
    inv_std = 1.0 / jnp.sqrt(params["bn_var"] + eps)
    scale = params["bn_gamma"] * inv_std
    shift = params["bn_beta"] - params["bn_mean"] * scale
    w1f = w1 * scale[None, :]
    b1f = b1 * scale + shift

    out_ch = w1.shape[1]
    n_classes = w2.shape[1]

    # ---- padding / tiling choices ----
    oc_p = _round_up(out_ch, 128)           # lane-dense hidden dim
    nc_p = _round_up(n_classes, 128)        # lane-dense output (no vst.msk)
    kt = min(k_tile, _round_up(K, 128))     # K tile (multiple of 128)
    K_p = _round_up(K, kt)
    tb = min(128, _round_up(B, 8))          # batch tile (multiple of 8)
    B_p = _round_up(B, tb)
    num_b = B_p // tb
    num_k = K_p // kt

    # Zero-padded, bf16 operands for the MXU; biases stay f32.
    x_p = jnp.zeros((B_p, K_p), jnp.bfloat16).at[:B, :K].set(x.astype(jnp.bfloat16))
    w1_p = jnp.zeros((K_p, oc_p), jnp.bfloat16).at[:K, :out_ch].set(w1f.astype(jnp.bfloat16))
    b1_p = jnp.zeros((1, oc_p), jnp.float32).at[0, :out_ch].set(b1f)
    w2_p = jnp.zeros((oc_p, nc_p), jnp.bfloat16).at[:out_ch, :n_classes].set(w2.astype(jnp.bfloat16))
    b2_p = jnp.zeros((1, nc_p), jnp.float32).at[0, :n_classes].set(b2)

    out_shape = jax.ShapeDtypeStruct((B_p, nc_p), jnp.float32)

    cost = pl.CostEstimate(
        flops=2 * B_p * K_p * oc_p + 2 * B_p * oc_p * nc_p,
        transcendentals=0,
        bytes_accessed=(x_p.size * 2 + w1_p.size * 2 + w2_p.size * 2
                        + b1_p.size * 4 + b2_p.size * 4 + B_p * nc_p * 4),
    )

    out_p = pl.pallas_call(
        head_kernel,
        out_shape=out_shape,
        grid_spec=pltpu.PrefetchScalarGridSpec(
            num_scalar_prefetch=0,
            grid=(num_b, num_k),
            in_specs=[
                pl.BlockSpec((tb, kt), lambda b, k: (b, k)),      # x
                pl.BlockSpec((kt, oc_p), lambda b, k: (k, 0)),    # w1 (BN-folded)
                pl.BlockSpec((1, oc_p), lambda b, k: (0, 0)),     # b1 (BN-folded)
                pl.BlockSpec((oc_p, nc_p), lambda b, k: (0, 0)),  # w2
                pl.BlockSpec((1, nc_p), lambda b, k: (0, 0)),     # b2
            ],
            out_specs=pl.BlockSpec((tb, nc_p), lambda b, k: (b, 0)),
            scratch_shapes=[pltpu.VMEM((tb, oc_p), jnp.float32)],
        ),
        compiler_params=pltpu.CompilerParams(
            dimension_semantics=("parallel", "arbitrary"),
            vmem_limit_bytes=32 * 1024 * 1024,
        ),
        cost_estimate=cost,
    )(x_p, w1_p, b1_p, w2_p, b2_p)

    return out_p[:B, :n_classes]


def init_params(key, in_features, out_channels, n_classes):
    """Deterministic init matching PyTorch nn.Linear default U(-1/sqrt(fan_in), 1/sqrt(fan_in))."""
    k1, k2, k3, k4 = jax.random.split(key, 4)
    lim1 = 1.0 / jnp.sqrt(in_features)
    lim2 = 1.0 / jnp.sqrt(out_channels)
    return {
        "w1": jax.random.uniform(k1, (in_features, out_channels), jnp.float32, -lim1, lim1),
        "b1": jax.random.uniform(k2, (1, out_channels), jnp.float32, -lim1, lim1),
        "w2": jax.random.uniform(k3, (out_channels, n_classes), jnp.float32, -lim2, lim2),
        "b2": jax.random.uniform(k4, (1, n_classes), jnp.float32, -lim2, lim2),
        # BatchNorm1d default init: gamma=1, beta=0, running_mean=0, running_var=1
        "bn_gamma": jnp.ones((out_channels,), jnp.float32),
        "bn_beta": jnp.zeros((out_channels,), jnp.float32),
        "bn_mean": jnp.zeros((out_channels,), jnp.float32),
        "bn_var": jnp.ones((out_channels,), jnp.float32),
    }


def reference_forward(x_nchw, params):
    """Pure-JAX f32 reference of the same eval-mode forward pass."""
    B = x_nchw.shape[0]
    x = x_nchw.reshape(B, -1).astype(jnp.float32)
    h = x @ params["w1"] + params["b1"]
    eps = 1e-5
    h = (h - params["bn_mean"]) / jnp.sqrt(params["bn_var"] + eps)
    h = h * params["bn_gamma"] + params["bn_beta"]
    h = jnp.where(h >= 0.0, h, 0.01 * h)
    return h @ params["w2"] + params["b2"]


if __name__ == "__main__":
    key = jax.random.PRNGKey(0)
    kx, kp = jax.random.split(key)

    # Small shapes: batch=2, channels=4, spatial=16x16 -> in_features=1024
    B, C, H, W = 2, 4, 16, 16
    in_features = C * H * W        # 1024
    out_channels = 256
    n_classes = 10
    p = 0.1                        # dropout prob (identity at inference)

    x = jax.random.normal(kx, (B, C, H, W), jnp.float32)
    params = init_params(kp, in_features, out_channels, n_classes)

    out = head_forward(x, params)
    out = jax.block_until_ready(out)

    ref = reference_forward(x, params)
    assert out.shape == (B, n_classes)
    # bf16 matmul inputs vs f32 reference -> loosened tolerance (f32 accumulation kept).
    assert jnp.allclose(out, ref, atol=3e-2, rtol=3e-2), "mismatch vs JAX reference"

    print("KERNEL_OK")
</pallas_src>

<mosaic_0001>
module attributes {stable_mosaic.version = 11 : i64} {
  func.func @head_kernel(%arg0: i32, %arg1: i32, %arg2: memref<8x512xbf16, #tpu.memory_space<vmem>>, %arg3: memref<512x256xbf16, #tpu.memory_space<vmem>>, %arg4: memref<1x256xf32, #tpu.memory_space<vmem>>, %arg5: memref<256x128xbf16, #tpu.memory_space<vmem>>, %arg6: memref<1x128xf32, #tpu.memory_space<vmem>>, %arg7: memref<8x128xf32, #tpu.memory_space<vmem>>, %arg8: memref<8x256xf32, #tpu.memory_space<vmem>>) attributes {dimension_semantics = [#tpu.dimension_semantics<parallel>, #tpu.dimension_semantics<arbitrary>], iteration_bounds = array<i64: 1, 2>, scalar_prefetch = 0 : i64, scratch_operands = 1 : i64, tpu.core_type = #tpu.core_type<tc>, window_params = [{transform_indices = @transform_0, window_bounds = array<i64: 8, 512>}, {transform_indices = @transform_1, window_bounds = array<i64: 512, 256>}, {pipeline_mode = #tpu.pipeline_mode<synchronous>, transform_indices = @transform_2, window_bounds = array<i64: 1, 256>}, {pipeline_mode = #tpu.pipeline_mode<synchronous>, transform_indices = @transform_3, window_bounds = array<i64: 256, 128>}, {pipeline_mode = #tpu.pipeline_mode<synchronous>, transform_indices = @transform_4, window_bounds = array<i64: 1, 128>}, {transform_indices = @transform_5, window_bounds = array<i64: 8, 128>}]} {
    %c0_i32 = arith.constant 0 : i32
    %0 = arith.cmpi eq, %arg1, %c0_i32 : i32
    %1 = arith.extui %0 : i1 to i32
    %c0_i32_0 = arith.constant 0 : i32
    %2 = arith.cmpi ne, %1, %c0_i32_0 : i32
    scf.if %2 {
      %cst_9 = arith.constant 0.000000e+00 : f32
      %12 = vector.broadcast %cst_9 : f32 to vector<8x256xf32>
      %c0_10 = arith.constant 0 : index
      %c0_11 = arith.constant 0 : index
      %13 = vector.load %arg8[%c0_10, %c0_11] : memref<8x256xf32, #tpu.memory_space<vmem>>, vector<8x256xf32>
      tpu.vector_store %arg8[%c0_10, %c0_11], %12 {strides = array<i32>} : memref<8x256xf32, #tpu.memory_space<vmem>>, vector<8x256xf32>,
    } else {
    }
    %c0 = arith.constant 0 : index
    %c0_1 = arith.constant 0 : index
    %3 = vector.load %arg8[%c0, %c0_1] : memref<8x256xf32, #tpu.memory_space<vmem>>, vector<8x256xf32>
    %c0_2 = arith.constant 0 : index
    %c0_3 = arith.constant 0 : index
    %4 = vector.load %arg2[%c0_2, %c0_3] : memref<8x512xbf16, #tpu.memory_space<vmem>>, vector<8x512xbf16>
    %c0_4 = arith.constant 0 : index
    %c0_5 = arith.constant 0 : index
    %5 = vector.load %arg3[%c0_4, %c0_5] : memref<512x256xbf16, #tpu.memory_space<vmem>>, vector<512x256xbf16>
    %cst = arith.constant dense<0.000000e+00> : vector<8x256xf32>
    %6 = tpu.matmul %4, %5, %cst {dimension_numbers = #tpu.dot_dimension_numbers<[1], [0], [0], [1], [0, 0, 1, 1], [], []>} : vector<8x512xbf16>, vector<512x256xbf16>, vector<8x256xf32> -> vector<8x256xf32>
    %7 = arith.addf %3, %6 : vector<8x256xf32>
    %c0_6 = arith.constant 0 : index
    %c0_7 = arith.constant 0 : index
    %8 = vector.load %arg8[%c0_6, %c0_7] : memref<8x256xf32, #tpu.memory_space<vmem>>, vector<8x256xf32>
    tpu.vector_store %arg8[%c0_6, %c0_7], %7 {strides = array<i32>} : memref<8x256xf32, #tpu.memory_space<vmem>>, vector<8x256xf32>,
    %c1_i32 = arith.constant 1 : i32
    %9 = arith.cmpi eq, %arg1, %c1_i32 : i32
    %10 = arith.extui %9 : i1 to i32
    %c0_i32_8 = arith.constant 0 : i32
    %11 = arith.cmpi ne, %10, %c0_i32_8 : i32
    scf.if %11 {
      %c0_9 = arith.constant 0 : index
      %c0_10 = arith.constant 0 : index
      %12 = vector.load %arg8[%c0_9, %c0_10] : memref<8x256xf32, #tpu.memory_space<vmem>>, vector<8x256xf32>
      %c0_11 = arith.constant 0 : index
      %c0_12 = arith.constant 0 : index
      %13 = vector.load %arg4[%c0_11, %c0_12] : memref<1x256xf32, #tpu.memory_space<vmem>>, vector<1x256xf32>
      %14 = vector.broadcast %13 : vector<1x256xf32> to vector<8x256xf32>
      %15 = arith.addf %12, %14 : vector<8x256xf32>
      %cst_13 = arith.constant 0.000000e+00 : f32
      %16 = vector.broadcast %cst_13 : f32 to vector<8x256xf32>
      %17 = arith.cmpf oge, %15, %16 : vector<8x256xf32>
      %cst_14 = arith.constant 0.00999999977 : f32
      %18 = vector.broadcast %cst_14 : f32 to vector<8x256xf32>
      %19 = arith.mulf %18, %15 : vector<8x256xf32>
      %20 = arith.select %17, %15, %19 : vector<8x256xi1>, vector<8x256xf32>
      %21 = arith.truncf %20 : vector<8x256xf32> to vector<8x256xbf16>
      %c0_15 = arith.constant 0 : index
      %c0_16 = arith.constant 0 : index
      %22 = vector.load %arg5[%c0_15, %c0_16] : memref<256x128xbf16, #tpu.memory_space<vmem>>, vector<256x128xbf16>
      %cst_17 = arith.constant dense<0.000000e+00> : vector<8x128xf32>
      %23 = tpu.matmul %21, %22, %cst_17 {dimension_numbers = #tpu.dot_dimension_numbers<[1], [0], [0], [1], [0, 0, 1, 1], [], []>} : vector<8x256xbf16>, vector<256x128xbf16>, vector<8x128xf32> -> vector<8x128xf32>
      %c0_18 = arith.constant 0 : index
      %c0_19 = arith.constant 0 : index
      %24 = vector.load %arg6[%c0_18, %c0_19] : memref<1x128xf32, #tpu.memory_space<vmem>>, vector<1x128xf32>
      %25 = vector.broadcast %24 : vector<1x128xf32> to vector<8x128xf32>
      %26 = arith.addf %23, %25 : vector<8x128xf32>
      %c0_20 = arith.constant 0 : index
      %c0_21 = arith.constant 0 : index
      %27 = vector.load %arg7[%c0_20, %c0_21] : memref<8x128xf32, #tpu.memory_space<vmem>>, vector<8x128xf32>
      tpu.vector_store %arg7[%c0_20, %c0_21], %26 {strides = array<i32>} : memref<8x128xf32, #tpu.memory_space<vmem>>, vector<8x128xf32>,
    } else {
    }
    return
  }
  func.func @transform_0(%arg0: i32, %arg1: i32) -> (i32, i32) {
    %c0_i32 = arith.constant 0 : i32
    return %arg0, %arg1 : i32, i32
  }
  func.func @transform_1(%arg0: i32, %arg1: i32) -> (i32, i32) {
    %c0_i32 = arith.constant 0 : i32
    %c0_i32_0 = arith.constant 0 : i32
    return %arg1, %c0_i32 : i32, i32
  }
  func.func @transform_2(%arg0: i32, %arg1: i32) -> (i32, i32) {
    %c0_i32 = arith.constant 0 : i32
    %c0_i32_0 = arith.constant 0 : i32
    %c0_i32_1 = arith.constant 0 : i32
    return %c0_i32, %c0_i32_0 : i32, i32
  }
  func.func @transform_3(%arg0: i32, %arg1: i32) -> (i32, i32) {
    %c0_i32 = arith.constant 0 : i32
    %c0_i32_0 = arith.constant 0 : i32
    %c0_i32_1 = arith.constant 0 : i32
    return %c0_i32, %c0_i32_0 : i32, i32
  }
  func.func @transform_4(%arg0: i32, %arg1: i32) -> (i32, i32) {
    %c0_i32 = arith.constant 0 : i32
    %c0_i32_0 = arith.constant 0 : i32
    %c0_i32_1 = arith.constant 0 : i32
    return %c0_i32, %c0_i32_0 : i32, i32
  }
  func.func @transform_5(%arg0: i32, %arg1: i32) -> (i32, i32) {
    %c0_i32 = arith.constant 0 : i32
    %c0_i32_0 = arith.constant 0 : i32
    return %arg0, %c0_i32 : i32, i32
  }
}

</mosaic_0001>

<llo_original>
// kernel: tpu_custom_call.1
$region0: #{tpu_custom_call.1}
  #allocation0 [shape = 'u32[]', space=smem, size = 0x4, offset = 0x4, fixed_abs, tag = 'smem constant byte address 0x4 - core index']
  #allocation1 [shape = 'u32[72,128]{1,0:T(1,128)}', space=vmem, size = 0x9000, scoped, tag = 'internal scratch']
  #allocation2 [shape = 'f32[8,256]{1,0:T(8,128)}', space=vmem, size = 0x2000, scoped, tag = 'scratch operand']
  %s0 = inlined_call_operand.hbm [shape: bf16[8,1024], index: 0, kind: input, shape index: {}]
  %s1 = inlined_call_operand.hbm [shape: bf16[1024,256], index: 1, kind: input, shape index: {}]
  %s2 = inlined_call_operand.hbm [shape: f32[1,256], index: 2, kind: input, shape index: {}]
  %s3 = inlined_call_operand.hbm [shape: bf16[256,128], index: 3, kind: input, shape index: {}]
  %s4 = inlined_call_operand.vmem [shape: f32[1,128], index: 4, kind: input, shape index: {}]
  %s5 = inlined_call_operand.hbm [shape: f32[8,128], index: 5, kind: output, shape index: {}]
  %s6 = sld [smem:[#allocation0]]
  $region77: #{tpu_custom_call.1} parent=0
    _
  %s8 = ssub.s32 1, %s6
  %s9 = scalar_select 0, %s8, %s6
  $region1: #{tpu_custom_call.1} parent=0
    #allocation3 [shape = 'u8[16384]{0}', space=vmem, size = 0x4000, scoped, tag = 'input window, operand 0']
    #allocation4 [shape = 's32[2]{0}', space=sflag, size = 0x8, scoped, tag = 'scoped memory for tpu_custom_call.1']
    #allocation5 [shape = 's32[2]{0}', space=sflag, size = 0x8, scoped, tag = 'scoped memory for tpu_custom_call.1']
    #allocation6 [shape = 'u8[524288]{0}', space=vmem, size = 0x80000, scoped, tag = 'input window, operand 1']
    #allocation7 [shape = 's32[2]{0}', space=sflag, size = 0x8, scoped, tag = 'scoped memory for tpu_custom_call.1']
    #allocation8 [shape = 'u8[1024]{0}', space=vmem, size = 0x400, scoped, tag = 'input window, operand 2, single buffered']
    #allocation9 [shape = 'u8[65536]{0}', space=vmem, size = 0x10000, scoped, tag = 'input window, operand 3, single buffered']
    #allocation10 [shape = 's32[1]{0}', space=sflag, size = 0x4, scoped, tag = 'scoped memory for tpu_custom_call.1']
    #allocation11 [shape = 'u8[4096]{0}', space=vmem, size = 0x1000, scoped, tag = 'output window, operand 0, single buffered']
    %10 = vsyncpa [#allocation4], 0
    %s11 = scalar_lea.sflag [#allocation4], 1
    %12 = vsyncpa %s11, 0
    %13 = vsyncpa [#allocation7], 0
    %s14 = scalar_lea.sflag [#allocation7], 1
    %15 = vsyncpa %s14, 0
    %16 = vsyncpa [#allocation10], 0
    %17 = vsyncpa [#allocation5], 0
    loop: start=0, step=1, limit=4
    $region2: #{tpu_custom_call.1} parent=1 // loop_pre_header
      _
    $region3: #{tpu_custom_call.1} parent=1 // loop_header
      %s19 = sphi 0, %s23
      %p20 = scmp.ge.s32.totalorder %s19, 4
      %s26 = sphi 0, %s38
      %s27 = sphi 0, %s34
      %s28 = sphi 0, %s26
      %s29 = sphi 0, %s27
      %s30 = sphi 0, %s28
      %s31 = sphi 0, %s29
      %s43 = sphi 0, %s45
      %s46 = sphi 0, %s43
      %s47 = sphi 0, %s46
      %s63 = sphi 0, %s47
      %s69 = sphi 0, %s71
      %s72 = sphi 0, %s69
      %s73 = sphi 0, %s72
      %s89 = sphi 0, %s73
      %s93 = sphi 0, %s93
      %s95 = sphi 0, %s93
      %s96 = sphi 0, %s95
      %s110 = sphi 0, %s96
      %s114 = sphi 0, %s114
      %s116 = sphi 0, %s114
      %s117 = sphi 0, %s116
      %s131 = sphi 0, %s117
      %s135 = sphi 0, %s135
      %s137 = sphi 0, %s135
      %s138 = sphi 0, %s137
      %s152 = sphi 0, %s138
      %s158 = sphi 0, %s160
      %s161 = sphi 0, %s158
      %s162 = sphi 0, %s161
      %s178 = sphi 0, %s162
    $region4: #{tpu_custom_call.1} parent=1 // loop_header_branch
      %22 = sbr.rel (%p20) target = $region8
    $region5: #{tpu_custom_call.1} parent=1 // loop_body
      %s24 = ssub.s32 %s19, 1
      %s25 = ssub.s32 %s19, 2
      %s32 = sadd.s32 1, %s27
      %p33 = scmp.ge.s32.totalorder %s32, 2
      %s34 = scalar_select %p33, 0, %s32
      %s35 = sadd.s32 1, %s26
      %s36 = scalar_select %p33, %s35, %s26
      %p37 = scmp.ge.s32.totalorder %s36, 1
      %s38 = scalar_select %p37, 0, %s36
      %s39 = ssub.s32 %s26, %s38
      %s40 = ssub.s32 %s27, %s34
      %s41 = sor.u32 %s39, %s40
      %p42 = scmp.eq.s32.totalorder %s41, 0
      %s44 = sadd.s32 %s43, 1
      %s45 = scalar_select %p42, %s43, %s44
      %p48 = pneg %p42
      %p49 = scmp.eq.s32.totalorder %s19, 1
      %p50 = por %p48, %p49
      %p51 = scmp.ne.s32.totalorder %s43, %s46
      %p52 = scmp.eq.s32.totalorder %s19, 0
      %p53 = por %p51, %p52
      %p54 = scmp.ne.s32.totalorder %s43, %s46
      %p55 = scmp.eq.s32.totalorder %s24, 1
      %p56 = por %p54, %p55
      %p57 = scmp.ne.s32.totalorder %s46, %s47
      %p58 = scmp.eq.s32.totalorder %s24, 0
      %p59 = por %p57, %p58
      %p60 = scmp.ne.s32.totalorder %s46, %s47
      %p61 = scmp.eq.s32.totalorder %s25, 1
      %p62 = por %p60, %p61
      %p64 = scmp.ne.s32.totalorder %s47, %s63
      %p65 = scmp.eq.s32.totalorder %s25, 0
      %p66 = por %p64, %p65
      %s67 = ssub.s32 %s27, %s34
      %p68 = scmp.eq.s32.totalorder %s67, 0
      %s70 = sadd.s32 %s69, 1
      %s71 = scalar_select %p68, %s69, %s70
      %p74 = pneg %p68
      %p75 = scmp.eq.s32.totalorder %s19, 1
      %p76 = por %p74, %p75
      %p77 = scmp.ne.s32.totalorder %s69, %s72
      %p78 = scmp.eq.s32.totalorder %s19, 0
      %p79 = por %p77, %p78
      %p80 = scmp.ne.s32.totalorder %s69, %s72
      %p81 = scmp.eq.s32.totalorder %s24, 1
      %p82 = por %p80, %p81
      %p83 = scmp.ne.s32.totalorder %s72, %s73
      %p84 = scmp.eq.s32.totalorder %s24, 0
      %p85 = por %p83, %p84
      %p86 = scmp.ne.s32.totalorder %s72, %s73
      %p87 = scmp.eq.s32.totalorder %s25, 1
      %p88 = por %p86, %p87
      %p90 = scmp.ne.s32.totalorder %s73, %s89
      %p91 = scmp.eq.s32.totalorder %s25, 0
      %p92 = por %p90, %p91
      %s94 = sadd.s32 %s93, 1
      %p97 = scmp.eq.s32.totalorder %s19, 1
      %p98 = scmp.ne.s32.totalorder %s93, %s95
      %p99 = scmp.eq.s32.totalorder %s19, 0
      %p100 = por %p98, %p99
      %p101 = scmp.ne.s32.totalorder %s93, %s95
      %p102 = scmp.eq.s32.totalorder %s24, 1
      %p103 = por %p101, %p102
      %p104 = scmp.ne.s32.totalorder %s95, %s96
      %p105 = scmp.eq.s32.totalorder %s24, 0
      %p106 = por %p104, %p105
      %p107 = scmp.ne.s32.totalorder %s95, %s96
      %p108 = scmp.eq.s32.totalorder %s25, 1
      %p109 = por %p107, %p108
      %p111 = scmp.ne.s32.totalorder %s96, %s110
      %p112 = scmp.eq.s32.totalorder %s25, 0
      %p113 = por %p111, %p112
      %s115 = sadd.s32 %s114, 1
      %p118 = scmp.eq.s32.totalorder %s19, 1
      %p119 = scmp.ne.s32.totalorder %s114, %s116
      %p120 = scmp.eq.s32.totalorder %s19, 0
      %p121 = por %p119, %p120
      %p122 = scmp.ne.s32.totalorder %s114, %s116
      %p123 = scmp.eq.s32.totalorder %s24, 1
      %p124 = por %p122, %p123
      %p125 = scmp.ne.s32.totalorder %s116, %s117
      %p126 = scmp.eq.s32.totalorder %s24, 0
      %p127 = por %p125, %p126
      %p128 = scmp.ne.s32.totalorder %s116, %s117
      %p129 = scmp.eq.s32.totalorder %s25, 1
      %p130 = por %p128, %p129
      %p132 = scmp.ne.s32.totalorder %s117, %s131
      %p133 = scmp.eq.s32.totalorder %s25, 0
      %p134 = por %p132, %p133
      %s136 = sadd.s32 %s135, 1
      %p139 = scmp.eq.s32.totalorder %s19, 1
      %p140 = scmp.ne.s32.totalorder %s135, %s137
      %p141 = scmp.eq.s32.totalorder %s19, 0
      %p142 = por %p140, %p141
      %p143 = scmp.ne.s32.totalorder %s135, %s137
      %p144 = scmp.eq.s32.totalorder %s24, 1
      %p145 = por %p143, %p144
      %p146 = scmp.ne.s32.totalorder %s137, %s138
      %p147 = scmp.eq.s32.totalorder %s24, 0
      %p148 = por %p146, %p147
      %p149 = scmp.ne.s32.totalorder %s137, %s138
      %p150 = scmp.eq.s32.totalorder %s25, 1
      %p151 = por %p149, %p150
      %p153 = scmp.ne.s32.totalorder %s138, %s152
      %p154 = scmp.eq.s32.totalorder %s25, 0
      %p155 = por %p153, %p154
      %s156 = ssub.s32 %s26, %s38
      %p157 = scmp.eq.s32.totalorder %s156, 0
      %s159 = sadd.s32 %s158, 1
      %s160 = scalar_select %p157, %s158, %s159
      %p163 = pneg %p157
      %p164 = scmp.eq.s32.totalorder %s19, 1
      %p165 = por %p163, %p164
      %p166 = scmp.ne.s32.totalorder %s158, %s161
      %p167 = scmp.eq.s32.totalorder %s19, 0
      %p168 = por %p166, %p167
      %p169 = scmp.ne.s32.totalorder %s158, %s161
      %p170 = scmp.eq.s32.totalorder %s24, 1
      %p171 = por %p169, %p170
      %p172 = scmp.ne.s32.totalorder %s161, %s162
      %p173 = scmp.eq.s32.totalorder %s24, 0
      %p174 = por %p172, %p173
      %p175 = scmp.ne.s32.totalorder %s161, %s162
      %p176 = scmp.eq.s32.totalorder %s25, 1
      %p177 = por %p175, %p176
      %p179 = scmp.ne.s32.totalorder %s162, %s178
      %p180 = scmp.eq.s32.totalorder %s25, 0
      %p181 = por %p179, %p180
      %p182 = scmp.le.s32.totalorder 1, %s19
      %p183 = scmp.lt.s32.totalorder %s19, 3
      %p184 = pnand %p182, %p183
      %p185 = pneg %p184
      // Predicated region
      $region9: #{tpu_custom_call.1} parent=5 // pred_check
        _
      $region10: #{tpu_custom_call.1} parent=5 // pred_check_branch
        %187 = sbr.rel (%p184) target = $region12
      $region11: #{tpu_custom_call.1} parent=5 // pred_region
        %s188 = ssub.s32 %s19, 1
        // Predicated region
        $region13: #{tpu_custom_call.1} parent=11 // pred_check
          %p189 = pneg %p106
        $region14: #{tpu_custom_call.1} parent=11 // pred_check_branch
          %191 = sbr.rel (%p189) target = $region16
        $region15: #{tpu_custom_call.1} parent=11 // pred_region
          %193 = vsyncadd [#allocation7], 0
          %s195 = sshll.u32 %s2, 4
          %s196 = int_to_ptr.hbm [resolvable:$true] %s195
          %s197 = sshll.u32 [#allocation8], 4
          %s198 = int_to_ptr.vmem [resolvable:$true] %s197
          %200 = dma.hbm_to_vmem [thread:$0]  %s196, 32, %s198, [#allocation7]
        $region16: #{tpu_custom_call.1} parent=11 // pred_fallthru
          _
        // Predicated region
        $region17: #{tpu_custom_call.1} parent=11 // pred_check
          %p201 = pneg %p127
        $region18: #{tpu_custom_call.1} parent=11 // pred_check_branch
          %203 = sbr.rel (%p201) target = $region20
        $region19: #{tpu_custom_call.1} parent=11 // pred_region
          %205 = vsyncadd [#allocation10], 0
          %s206 = sshll.u32 %s3, 4
          %s207 = int_to_ptr.hbm [resolvable:$true] %s206
          %s208 = sshll.u32 [#allocation9], 4
          %s209 = int_to_ptr.vmem [resolvable:$true] %s208
          %214 = dma.hbm_to_vmem [thread:$0]  %s207, 2048, %s209, [#allocation10], 64, 64, 4
        $region20: #{tpu_custom_call.1} parent=11 // pred_fallthru
          _
        // Predicated region
        $region21: #{tpu_custom_call.1} parent=11 // pred_check
          %p215 = pneg %p148
        $region22: #{tpu_custom_call.1} parent=11 // pred_check_branch
          %217 = sbr.rel (%p215) target = $region24
        $region23: #{tpu_custom_call.1} parent=11 // pred_region
          _
        $region24: #{tpu_custom_call.1} parent=11 // pred_fallthru
          _
      $region12: #{tpu_custom_call.1} parent=5 // pred_fallthru
        _
      %p218 = scmp.lt.s32.totalorder %s19, 2
      // Predicated region
      $region25: #{tpu_custom_call.1} parent=5 // pred_check
        %p219 = pneg %p218
      $region26: #{tpu_custom_call.1} parent=5 // pred_check_branch
        %221 = sbr.rel (%p219) target = $region28
      $region27: #{tpu_custom_call.1} parent=5 // pred_region
        // Predicated region
        $region29: #{tpu_custom_call.1} parent=27 // pred_check
          %p222 = pneg %p53
        $region30: #{tpu_custom_call.1} parent=27 // pred_check_branch
          %224 = sbr.rel (%p222) target = $region32
        $region31: #{tpu_custom_call.1} parent=27 // pred_region
          %s225 = sand.u32 %s43, 1
          %s226 = scalar_lea.sflag [#allocation4], %s225
          %s227 = sand.u32 %s43, 1
          %s228 = smul.addr %s227, 16
          %s229 = scalar_lea.vmem [#allocation3], %s228
          %s230 = smul.u32 4, %s27
          %232 = vsyncadd %s226, 0
          %s233 = smul.addr %s26, 8
          %s234 = sadd.s32 %s230, %s233
          %s235 = smul.addr %s234, 4
          %s236 = scalar_lea.hbm %s0, %s235
          %s238 = sshll.u32 %s236, 4
          %s239 = int_to_ptr.hbm [resolvable:$true] %s238
          %s240 = sshll.u32 %s229, 4
          %s241 = int_to_ptr.vmem [resolvable:$true] %s240
          %243 = dma.hbm_to_vmem [thread:$0]  %s239, 256, %s241, %s226
        $region32: #{tpu_custom_call.1} parent=27 // pred_fallthru
          _
        // Predicated region
        $region33: #{tpu_custom_call.1} parent=27 // pred_check
          %p244 = pneg %p79
        $region34: #{tpu_custom_call.1} parent=27 // pred_check_branch
          %246 = sbr.rel (%p244) target = $region36
        $region35: #{tpu_custom_call.1} parent=27 // pred_region
          %s247 = sand.u32 %s19, 1
          %s248 = scalar_lea.sflag [#allocation7], %s247
          %s249 = sand.u32 %s69, 1
          %s250 = smul.addr %s249, 512
          %s251 = scalar_lea.vmem [#allocation6], %s250
          %s252 = smul.u32 64, %s27
          %254 = vsyncadd %s248, 0
          %s255 = smul.addr %s252, 2
          %s256 = smul.addr %s255, 4
          %s257 = scalar_lea.hbm %s1, %s256
          %s258 = sshll.u32 %s257, 4
          %s259 = int_to_ptr.hbm [resolvable:$true] %s258
          %s260 = sshll.u32 %s251, 4
          %s261 = int_to_ptr.vmem [resolvable:$true] %s260
          %266 = dma.hbm_to_vmem [thread:$0]  %s259, 8192, %s261, %s248, 128, 128, 8
        $region36: #{tpu_custom_call.1} parent=27 // pred_fallthru
          _
      $region28: #{tpu_custom_call.1} parent=5 // pred_fallthru
        _
      %p267 = scmp.le.s32.totalorder 1, %s19
      %p268 = scmp.lt.s32.totalorder %s19, 3
      %p269 = pnand %p267, %p268
      %p270 = pneg %p269
      // Predicated region
      $region37: #{tpu_custom_call.1} parent=5 // pred_check
        _
      $region38: #{tpu_custom_call.1} parent=5 // pred_check_branch
        %272 = sbr.rel (%p269) target = $region40
      $region39: #{tpu_custom_call.1} parent=5 // pred_region
        %s273 = ssub.s32 %s19, 1
        %s274 = sand.u32 %s46, 1
        %s275 = scalar_lea.sflag [#allocation4], %s274
        %s276 = sand.u32 %s46, 1
        %s277 = smul.addr %s276, 16
        %s278 = scalar_lea.vmem [#allocation3], %s277
        // Predicated region
        $region41: #{tpu_custom_call.1} parent=39 // pred_check
          %p279 = pneg %p59
        $region42: #{tpu_custom_call.1} parent=39 // pred_check_branch
          %281 = sbr.rel (%p279) target = $region44
        $region43: #{tpu_custom_call.1} parent=39 // pred_region
          %283 = dma.done %s275, 256
        $region44: #{tpu_custom_call.1} parent=39 // pred_fallthru
          _
        %s284 = sand.u32 %s24, 1
        %s285 = scalar_lea.sflag [#allocation7], %s284
        %s286 = sand.u32 %s72, 1
        %s287 = smul.addr %s286, 512
        %s288 = scalar_lea.vmem [#allocation6], %s287
        // Predicated region
        $region45: #{tpu_custom_call.1} parent=39 // pred_check
          %p289 = pneg %p85
        $region46: #{tpu_custom_call.1} parent=39 // pred_check_branch
          %291 = sbr.rel (%p289) target = $region48
        $region47: #{tpu_custom_call.1} parent=39 // pred_region
          %293 = dma.done %s285, 8192
        $region48: #{tpu_custom_call.1} parent=39 // pred_fallthru
          _
        // Predicated region
        $region49: #{tpu_custom_call.1} parent=39 // pred_check
          %p294 = pneg %p106
        $region50: #{tpu_custom_call.1} parent=39 // pred_check_branch
          %296 = sbr.rel (%p294) target = $region52
        $region51: #{tpu_custom_call.1} parent=39 // pred_region
          %298 = dma.done [#allocation7], 32
        $region52: #{tpu_custom_call.1} parent=39 // pred_fallthru
          _
        // Predicated region
        $region53: #{tpu_custom_call.1} parent=39 // pred_check
          %p299 = pneg %p127
        $region54: #{tpu_custom_call.1} parent=39 // pred_check_branch
          %301 = sbr.rel (%p299) target = $region56
        $region55: #{tpu_custom_call.1} parent=39 // pred_region
          %303 = dma.done [#allocation10], 2048
        $region56: #{tpu_custom_call.1} parent=39 // pred_fallthru
          _
        %s304 = sand.u32 %s46, 1
        %s305 = scalar_lea.sflag [#allocation4], %s304
        %s306 = sand.u32 %s46, 1
        %s307 = smul.addr %s306, 16
        %s308 = scalar_lea.vmem [#allocation3], %s307
        %p309 = pneg %p59
        %p310 = pneg %p56
        %s311 = sand.u32 %s24, 1
        %s312 = scalar_lea.sflag [#allocation7], %s311
        %s313 = sand.u32 %s72, 1
        %s314 = smul.addr %s313, 512
        %s315 = scalar_lea.vmem [#allocation6], %s314
        %p316 = pneg %p85
        %p317 = pneg %p82
        %p318 = pneg %p106
        %p319 = pneg %p103
        %p320 = pneg %p127
        %p321 = pneg %p124
        %p322 = pneg %p148
        %p323 = pneg %p145
        %p324 = pneg %p174
        %p325 = pneg %p171
        %s326 = smul.u32 4, %s29
        %s327 = smul.u32 64, %s29
        %p328 = scmp.eq.s32.totalorder %s29, 0
        // Predicated region
        $region57: #{tpu_custom_call.1} parent=39 // pred_check
          %p329 = pneg %p328
        $region58: #{tpu_custom_call.1} parent=39 // pred_check_branch
          %331 = sbr.rel (%p329) target = $region60
        $region59: #{tpu_custom_call.1} parent=39 // pred_region
          %332 = vst [vmem:[#allocation2] sm:$0xff] 0.0
          %333 = vst [vmem:[#allocation2 + $0x8] sm:$0xff] 0.0
        $region60: #{tpu_custom_call.1} parent=39 // pred_fallthru
          _
        %v334 = vld [vmem:[#allocation2] sm:$0xff]
        %v335 = vld [vmem:[#allocation2 + $0x8] sm:$0xff]
        %v336 = vld [vmem:[%s278] sm:$0xff]
        %v337 = vld [vmem:[%s278 + $0x8] sm:$0xff]
        %v338 = vld [vmem:[%s288] sm:$0xff]
        %v339 = vld [vmem:[%s288 + $0x8] sm:$0xff]
        %v340 = vld [vmem:[%s288 + $0x10] sm:$0xff]
        %v341 = vld [vmem:[%s288 + $0x18] sm:$0xff]
        %v342 = vld [vmem:[%s288 + $0x20] sm:$0xff]
        %v343 = vld [vmem:[%s288 + $0x28] sm:$0xff]
        %v344 = vld [vmem:[%s288 + $0x30] sm:$0xff]
        %v345 = vld [vmem:[%s288 + $0x38] sm:$0xff]
        %v346 = vld [vmem:[%s288 + $0x40] sm:$0xff]
        %v347 = vld [vmem:[%s288 + $0x48] sm:$0xff]
        %v348 = vld [vmem:[%s288 + $0x50] sm:$0xff]
        %v349 = vld [vmem:[%s288 + $0x58] sm:$0xff]
        %v350 = vld [vmem:[%s288 + $0x60] sm:$0xff]
        %v351 = vld [vmem:[%s288 + $0x68] sm:$0xff]
        %v352 = vld [vmem:[%s288 + $0x70] sm:$0xff]
        %v353 = vld [vmem:[%s288 + $0x78] sm:$0xff]
        %v354 = vld [vmem:[%s288 + $0x80] sm:$0xff]
        %v355 = vld [vmem:[%s288 + $0x88] sm:$0xff]
        %v356 = vld [vmem:[%s288 + $0x90] sm:$0xff]
        %v357 = vld [vmem:[%s288 + $0x98] sm:$0xff]
        %v358 = vld [vmem:[%s288 + $0xa0] sm:$0xff]
        %v359 = vld [vmem:[%s288 + $0xa8] sm:$0xff]
        %v360 = vld [vmem:[%s288 + $0xb0] sm:$0xff]
        %v361 = vld [vmem:[%s288 + $0xb8] sm:$0xff]
        %v362 = vld [vmem:[%s288 + $0xc0] sm:$0xff]
        %v363 = vld [vmem:[%s288 + $0xc8] sm:$0xff]
        %v364 = vld [vmem:[%s288 + $0xd0] sm:$0xff]
        %v365 = vld [vmem:[%s288 + $0xd8] sm:$0xff]
        %v366 = vld [vmem:[%s288 + $0xe0] sm:$0xff]
        %v367 = vld [vmem:[%s288 + $0xe8] sm:$0xff]
        %v368 = vld [vmem:[%s288 + $0xf0] sm:$0xff]
        %v369 = vld [vmem:[%s288 + $0xf8] sm:$0xff]
        %v370 = vld [vmem:[%s288 + $0x100] sm:$0xff]
        %v371 = vld [vmem:[%s288 + $0x108] sm:$0xff]
        %v372 = vld [vmem:[%s288 + $0x110] sm:$0xff]
        %v373 = vld [vmem:[%s288 + $0x118] sm:$0xff]
        %v374 = vld [vmem:[%s288 + $0x120] sm:$0xff]
        %v375 = vld [vmem:[%s288 + $0x128] sm:$0xff]
        %v376 = vld [vmem:[%s288 + $0x130] sm:$0xff]
        %v377 = vld [vmem:[%s288 + $0x138] sm:$0xff]
        %v378 = vld [vmem:[%s288 + $0x140] sm:$0xff]
        %v379 = vld [vmem:[%s288 + $0x148] sm:$0xff]
        %v380 = vld [vmem:[%s288 + $0x150] sm:$0xff]
        %v381 = vld [vmem:[%s288 + $0x158] sm:$0xff]
        %v382 = vld [vmem:[%s288 + $0x160] sm:$0xff]
        %v383 = vld [vmem:[%s288 + $0x168] sm:$0xff]
        %v384 = vld [vmem:[%s288 + $0x170] sm:$0xff]
        %v385 = vld [vmem:[%s288 + $0x178] sm:$0xff]
        %v386 = vld [vmem:[%s288 + $0x180] sm:$0xff]
        %v387 = vld [vmem:[%s288 + $0x188] sm:$0xff]
        %v388 = vld [vmem:[%s288 + $0x190] sm:$0xff]
        %v389 = vld [vmem:[%s288 + $0x198] sm:$0xff]
        %v390 = vld [vmem:[%s288 + $0x1a0] sm:$0xff]
        %v391 = vld [vmem:[%s288 + $0x1a8] sm:$0xff]
        %v392 = vld [vmem:[%s288 + $0x1b0] sm:$0xff]
        %v393 = vld [vmem:[%s288 + $0x1b8] sm:$0xff]
        %v394 = vld [vmem:[%s288 + $0x1c0] sm:$0xff]
        %v395 = vld [vmem:[%s288 + $0x1c8] sm:$0xff]
        %v396 = vld [vmem:[%s288 + $0x1d0] sm:$0xff]
        %v397 = vld [vmem:[%s288 + $0x1d8] sm:$0xff]
        %v398 = vld [vmem:[%s288 + $0x1e0] sm:$0xff]
        %v399 = vld [vmem:[%s288 + $0x1e8] sm:$0xff]
        %v400 = vld [vmem:[%s288 + $0x1f0] sm:$0xff]
        %v401 = vld [vmem:[%s288 + $0x1f8] sm:$0xff]
        %v404 = vunpack.c.l.b16 %v336
        %v405 = vunpack.c.h.b16 %v336
        %v406 = vunpack.c.l.b16 %v337
        %v407 = vunpack.c.h.b16 %v337
        %v408 = vpack.c.b16 %v404, %v404
        %v409 = vpack.c.b16 %v405, %v405
        %v410 = vpack.c.b16 %v406, %v406
        %v411 = vpack.c.b16 %v407, %v407
        %v480 = vunpack.c.l.b16 %v338
        %v481 = vunpack.c.h.b16 %v338
        %v482 = vunpack.c.l.b16 %v339
        %v483 = vunpack.c.h.b16 %v339
        %v484 = vunpack.c.l.b16 %v340
        %v485 = vunpack.c.h.b16 %v340
        %v486 = vunpack.c.l.b16 %v341
        %v487 = vunpack.c.h.b16 %v341
        %v488 = vunpack.c.l.b16 %v342
        %v489 = vunpack.c.h.b16 %v342
        %v490 = vunpack.c.l.b16 %v343
        %v491 = vunpack.c.h.b16 %v343
        %v492 = vunpack.c.l.b16 %v344
        %v493 = vunpack.c.h.b16 %v344
        %v494 = vunpack.c.l.b16 %v345
        %v495 = vunpack.c.h.b16 %v345
        %v496 = vunpack.c.l.b16 %v346
        %v497 = vunpack.c.h.b16 %v346
        %v498 = vunpack.c.l.b16 %v347
        %v499 = vunpack.c.h.b16 %v347
        %v500 = vunpack.c.l.b16 %v348
        %v501 = vunpack.c.h.b16 %v348
        %v502 = vunpack.c.l.b16 %v349
        %v503 = vunpack.c.h.b16 %v349
        %v504 = vunpack.c.l.b16 %v350
        %v505 = vunpack.c.h.b16 %v350
        %v506 = vunpack.c.l.b16 %v351
        %v507 = vunpack.c.h.b16 %v351
        %v508 = vunpack.c.l.b16 %v352
        %v509 = vunpack.c.h.b16 %v352
        %v510 = vunpack.c.l.b16 %v353
        %v511 = vunpack.c.h.b16 %v353
        %v512 = vunpack.c.l.b16 %v354
        %v513 = vunpack.c.h.b16 %v354
        %v514 = vunpack.c.l.b16 %v355
        %v515 = vunpack.c.h.b16 %v355
        %v516 = vunpack.c.l.b16 %v356
        %v517 = vunpack.c.h.b16 %v356
        %v518 = vunpack.c.l.b16 %v357
        %v519 = vunpack.c.h.b16 %v357
        %v520 = vunpack.c.l.b16 %v358
        %v521 = vunpack.c.h.b16 %v358
        %v522 = vunpack.c.l.b16 %v359
        %v523 = vunpack.c.h.b16 %v359
        %v524 = vunpack.c.l.b16 %v360
        %v525 = vunpack.c.h.b16 %v360
        %v526 = vunpack.c.l.b16 %v361
        %v527 = vunpack.c.h.b16 %v361
        %v528 = vunpack.c.l.b16 %v362
        %v529 = vunpack.c.h.b16 %v362
        %v530 = vunpack.c.l.b16 %v363
        %v531 = vunpack.c.h.b16 %v363
        %v532 = vunpack.c.l.b16 %v364
        %v533 = vunpack.c.h.b16 %v364
        %v534 = vunpack.c.l.b16 %v365
        %v535 = vunpack.c.h.b16 %v365
        %v536 = vunpack.c.l.b16 %v366
        %v537 = vunpack.c.h.b16 %v366
        %v538 = vunpack.c.l.b16 %v367
        %v539 = vunpack.c.h.b16 %v367
        %v540 = vunpack.c.l.b16 %v368
        %v541 = vunpack.c.h.b16 %v368
        %v542 = vunpack.c.l.b16 %v369
        %v543 = vunpack.c.h.b16 %v369
        %v544 = vunpack.c.l.b16 %v370
        %v545 = vunpack.c.h.b16 %v370
        %v546 = vunpack.c.l.b16 %v371
        %v547 = vunpack.c.h.b16 %v371
        %v548 = vunpack.c.l.b16 %v372
        %v549 = vunpack.c.h.b16 %v372
        %v550 = vunpack.c.l.b16 %v373
        %v551 = vunpack.c.h.b16 %v373
        %v552 = vunpack.c.l.b16 %v374
        %v553 = vunpack.c.h.b16 %v374
        %v554 = vunpack.c.l.b16 %v375
        %v555 = vunpack.c.h.b16 %v375
        %v556 = vunpack.c.l.b16 %v376
        %v557 = vunpack.c.h.b16 %v376
        %v558 = vunpack.c.l.b16 %v377
        %v559 = vunpack.c.h.b16 %v377
        %v560 = vunpack.c.l.b16 %v378
        %v561 = vunpack.c.h.b16 %v378
        %v562 = vunpack.c.l.b16 %v379
        %v563 = vunpack.c.h.b16 %v379
        %v564 = vunpack.c.l.b16 %v380
        %v565 = vunpack.c.h.b16 %v380
        %v566 = vunpack.c.l.b16 %v381
        %v567 = vunpack.c.h.b16 %v381
        %v568 = vunpack.c.l.b16 %v382
        %v569 = vunpack.c.h.b16 %v382
        %v570 = vunpack.c.l.b16 %v383
        %v571 = vunpack.c.h.b16 %v383
        %v572 = vunpack.c.l.b16 %v384
        %v573 = vunpack.c.h.b16 %v384
        %v574 = vunpack.c.l.b16 %v385
        %v575 = vunpack.c.h.b16 %v385
        %v576 = vunpack.c.l.b16 %v386
        %v577 = vunpack.c.h.b16 %v386
        %v578 = vunpack.c.l.b16 %v387
        %v579 = vunpack.c.h.b16 %v387
        %v580 = vunpack.c.l.b16 %v388
        %v581 = vunpack.c.h.b16 %v388
        %v582 = vunpack.c.l.b16 %v389
        %v583 = vunpack.c.h.b16 %v389
        %v584 = vunpack.c.l.b16 %v390
        %v585 = vunpack.c.h.b16 %v390
        %v586 = vunpack.c.l.b16 %v391
        %v587 = vunpack.c.h.b16 %v391
        %v588 = vunpack.c.l.b16 %v392
        %v589 = vunpack.c.h.b16 %v392
        %v590 = vunpack.c.l.b16 %v393
        %v591 = vunpack.c.h.b16 %v393
        %v592 = vunpack.c.l.b16 %v394
        %v593 = vunpack.c.h.b16 %v394
        %v594 = vunpack.c.l.b16 %v395
        %v595 = vunpack.c.h.b16 %v395
        %v596 = vunpack.c.l.b16 %v396
        %v597 = vunpack.c.h.b16 %v396
        %v598 = vunpack.c.l.b16 %v397
        %v599 = vunpack.c.h.b16 %v397
        %v600 = vunpack.c.l.b16 %v398
        %v601 = vunpack.c.h.b16 %v398
        %v602 = vunpack.c.l.b16 %v399
        %v603 = vunpack.c.h.b16 %v399
        %v604 = vunpack.c.l.b16 %v400
        %v605 = vunpack.c.h.b16 %v400
        %v606 = vunpack.c.l.b16 %v401
        %v607 = vunpack.c.h.b16 %v401
        %v608 = vpack.c.b16 %v482, %v480
        %v609 = vpack.c.b16 %v483, %v481
        %v610 = vpack.c.b16 %v486, %v484
        %v611 = vpack.c.b16 %v487, %v485
        %v612 = vpack.c.b16 %v490, %v488
        %v613 = vpack.c.b16 %v491, %v489
        %v614 = vpack.c.b16 %v494, %v492
        %v615 = vpack.c.b16 %v495, %v493
        %v616 = vpack.c.b16 %v498, %v496
        %v617 = vpack.c.b16 %v499, %v497
        %v618 = vpack.c.b16 %v502, %v500
        %v619 = vpack.c.b16 %v503, %v501
        %v620 = vpack.c.b16 %v506, %v504
        %v621 = vpack.c.b16 %v507, %v505
        %v622 = vpack.c.b16 %v510, %v508
        %v623 = vpack.c.b16 %v511, %v509
        %v624 = vpack.c.b16 %v514, %v512
        %v625 = vpack.c.b16 %v515, %v513
        %v626 = vpack.c.b16 %v518, %v516
        %v627 = vpack.c.b16 %v519, %v517
        %v628 = vpack.c.b16 %v522, %v520
        %v629 = vpack.c.b16 %v523, %v521
        %v630 = vpack.c.b16 %v526, %v524
        %v631 = vpack.c.b16 %v527, %v525
        %v632 = vpack.c.b16 %v530, %v528
        %v633 = vpack.c.b16 %v531, %v529
        %v634 = vpack.c.b16 %v534, %v532
        %v635 = vpack.c.b16 %v535, %v533
        %v636 = vpack.c.b16 %v538, %v536
        %v637 = vpack.c.b16 %v539, %v537
        %v638 = vpack.c.b16 %v542, %v540
        %v639 = vpack.c.b16 %v543, %v541
        %v640 = vpack.c.b16 %v546, %v544
        %v641 = vpack.c.b16 %v547, %v545
        %v642 = vpack.c.b16 %v550, %v548
        %v643 = vpack.c.b16 %v551, %v549
        %v644 = vpack.c.b16 %v554, %v552
        %v645 = vpack.c.b16 %v555, %v553
        %v646 = vpack.c.b16 %v558, %v556
        %v647 = vpack.c.b16 %v559, %v557
        %v648 = vpack.c.b16 %v562, %v560
        %v649 = vpack.c.b16 %v563, %v561
        %v650 = vpack.c.b16 %v566, %v564
        %v651 = vpack.c.b16 %v567, %v565
        %v652 = vpack.c.b16 %v570, %v568
        %v653 = vpack.c.b16 %v571, %v569
        %v654 = vpack.c.b16 %v574, %v572
        %v655 = vpack.c.b16 %v575, %v573
        %v656 = vpack.c.b16 %v578, %v576
        %v657 = vpack.c.b16 %v579, %v577
        %v658 = vpack.c.b16 %v582, %v580
        %v659 = vpack.c.b16 %v583, %v581
        %v660 = vpack.c.b16 %v586, %v584
        %v661 = vpack.c.b16 %v587, %v585
        %v662 = vpack.c.b16 %v590, %v588
        %v663 = vpack.c.b16 %v591, %v589
        %v664 = vpack.c.b16 %v594, %v592
        %v665 = vpack.c.b16 %v595, %v593
        %v666 = vpack.c.b16 %v598, %v596
        %v667 = vpack.c.b16 %v599, %v597
        %v668 = vpack.c.b16 %v602, %v600
        %v669 = vpack.c.b16 %v603, %v601
        %v670 = vpack.c.b16 %v606, %v604
        %v671 = vpack.c.b16 %v607, %v605
        %736 = vmatpush.bf16.msra.mxu0 %v622
        %737 = vmatpush.bf16.msra.mxu0 %v620
        %738 = vmatpush.bf16.msra.mxu0 %v618
        %739 = vmatpush.bf16.msra.mxu0 %v616
        %740 = vmatpush.bf16.msra.mxu0 %v614
        %741 = vmatpush.bf16.msra.mxu0 %v612
        %742 = vmatpush.bf16.msra.mxu0 %v610
        %743 = vmatpush.bf16.msra.mxu0 %v608
        %744 = vmatmul.bf16.gmra.mxu0 %v408
        %v745 = vpop.f32.mrf.mxu0
        %v746 = vadd.f32 0.0, %v745
        %v747 = vpop.f32.mrf.mxu0
        %748 = vdwg.mxu0
        %749 = vmatpush.bf16.msra.mxu0 %v638
        %750 = vmatpush.bf16.msra.mxu0 %v636
        %751 = vmatpush.bf16.msra.mxu0 %v634
        %752 = vmatpush.bf16.msra.mxu0 %v632
        %753 = vmatpush.bf16.msra.mxu0 %v630
        %754 = vmatpush.bf16.msra.mxu0 %v628
        %755 = vmatpush.bf16.msra.mxu0 %v626
        %756 = vmatpush.bf16.msra.mxu0 %v624
        %757 = vmatmul.bf16.gmra.mxu0 %v409
        %v758 = vpop.f32.mrf.mxu0
        %v759 = vadd.f32 %v746, %v758
        %v760 = vpop.f32.mrf.mxu0
        %761 = vdwg.mxu0
        %762 = vmatpush.bf16.msra.mxu0 %v654
        %763 = vmatpush.bf16.msra.mxu0 %v652
        %764 = vmatpush.bf16.msra.mxu0 %v650
        %765 = vmatpush.bf16.msra.mxu0 %v648
        %766 = vmatpush.bf16.msra.mxu0 %v646
        %767 = vmatpush.bf16.msra.mxu0 %v644
        %768 = vmatpush.bf16.msra.mxu0 %v642
        %769 = vmatpush.bf16.msra.mxu0 %v640
        %770 = vmatmul.bf16.gmra.mxu0 %v410
        %v771 = vpop.f32.mrf.mxu0
        %v772 = vadd.f32 %v759, %v771
        %v773 = vpop.f32.mrf.mxu0
        %774 = vdwg.mxu0
        %775 = vmatpush.bf16.msra.mxu0 %v670
        %776 = vmatpush.bf16.msra.mxu0 %v668
        %777 = vmatpush.bf16.msra.mxu0 %v666
        %778 = vmatpush.bf16.msra.mxu0 %v664
        %779 = vmatpush.bf16.msra.mxu0 %v662
        %780 = vmatpush.bf16.msra.mxu0 %v660
        %781 = vmatpush.bf16.msra.mxu0 %v658
        %782 = vmatpush.bf16.msra.mxu0 %v656
        %783 = vmatmul.bf16.gmra.mxu0 %v411
        %v784 = vpop.f32.mrf.mxu0
        %v785 = vadd.f32 %v772, %v784
        %v786 = vpop.f32.mrf.mxu0
        %787 = vdwg.mxu0
        %788 = vmatpush.bf16.msra.mxu0 %v623
        %789 = vmatpush.bf16.msra.mxu0 %v621
        %790 = vmatpush.bf16.msra.mxu0 %v619
        %791 = vmatpush.bf16.msra.mxu0 %v617
        %792 = vmatpush.bf16.msra.mxu0 %v615
        %793 = vmatpush.bf16.msra.mxu0 %v613
        %794 = vmatpush.bf16.msra.mxu0 %v611
        %795 = vmatpush.bf16.msra.mxu0 %v609
        %796 = vmatmul.bf16.gmra.mxu0 %v408
        %v797 = vpop.f32.mrf.mxu0
        %v798 = vadd.f32 0.0, %v797
        %v799 = vpop.f32.mrf.mxu0
        %800 = vdwg.mxu0
        %801 = vmatpush.bf16.msra.mxu0 %v639
        %802 = vmatpush.bf16.msra.mxu0 %v637
        %803 = vmatpush.bf16.msra.mxu0 %v635
        %804 = vmatpush.bf16.msra.mxu0 %v633
        %805 = vmatpush.bf16.msra.mxu0 %v631
        %806 = vmatpush.bf16.msra.mxu0 %v629
        %807 = vmatpush.bf16.msra.mxu0 %v627
        %808 = vmatpush.bf16.msra.mxu0 %v625
        %809 = vmatmul.bf16.gmra.mxu0 %v409
        %v810 = vpop.f32.mrf.mxu0
        %v811 = vadd.f32 %v798, %v810
        %v812 = vpop.f32.mrf.mxu0
        %813 = vdwg.mxu0
        %814 = vmatpush.bf16.msra.mxu0 %v655
        %815 = vmatpush.bf16.msra.mxu0 %v653
        %816 = vmatpush.bf16.msra.mxu0 %v651
        %817 = vmatpush.bf16.msra.mxu0 %v649
        %818 = vmatpush.bf16.msra.mxu0 %v647
        %819 = vmatpush.bf16.msra.mxu0 %v645
        %820 = vmatpush.bf16.msra.mxu0 %v643
        %821 = vmatpush.bf16.msra.mxu0 %v641
        %822 = vmatmul.bf16.gmra.mxu0 %v410
        %v823 = vpop.f32.mrf.mxu0
        %v824 = vadd.f32 %v811, %v823
        %v825 = vpop.f32.mrf.mxu0
        %826 = vdwg.mxu0
        %827 = vmatpush.bf16.msra.mxu0 %v671
        %828 = vmatpush.bf16.msra.mxu0 %v669
        %829 = vmatpush.bf16.msra.mxu0 %v667
        %830 = vmatpush.bf16.msra.mxu0 %v665
        %831 = vmatpush.bf16.msra.mxu0 %v663
        %832 = vmatpush.bf16.msra.mxu0 %v661
        %833 = vmatpush.bf16.msra.mxu0 %v659
        %834 = vmatpush.bf16.msra.mxu0 %v657
        %835 = vmatmul.bf16.gmra.mxu0 %v411
        %v836 = vpop.f32.mrf.mxu0
        %v837 = vadd.f32 %v824, %v836
        %v838 = vpop.f32.mrf.mxu0
        %839 = vdwg.mxu0
        %v840 = vadd.f32 %v334, %v785
        %v841 = vadd.f32 %v335, %v837
        %842 = vst [vmem:[#allocation2] sm:$0xff] %v840
        %843 = vst [vmem:[#allocation2 + $0x8] sm:$0xff] %v841
        %p844 = scmp.eq.s32.totalorder %s29, 1
        // Predicated region
        $region61: #{tpu_custom_call.1} parent=39 // pred_check
          %p845 = pneg %p844
        $region62: #{tpu_custom_call.1} parent=39 // pred_check_branch
          %847 = sbr.rel (%p845) target = $region64
        $region63: #{tpu_custom_call.1} parent=39 // pred_region
          %v848 = vld [vmem:[#allocation2] sm:$0xff]
          %v849 = vld [vmem:[#allocation2 + $0x8] sm:$0xff]
          %v850 = vld [vmem:[#allocation8] sm:$0x3]
          %v852 = vperm.slane %v850, 0
          %v853 = vperm.slane %v850, 1
          %v856 = vadd.f32 %v848, %v852
          %v857 = vadd.f32 %v849, %v853
          %vm858 = vcmp.ge.f32.partialorder %v856, 0.0
          %vm859 = vcmp.ge.f32.partialorder %v857, 0.0
          %v860 = vmul.f32 %v856, 0.01
          %v861 = vmul.f32 %v857, 0.01
          %v862 = vsel %vm858, %v856, %v860
          %v863 = vsel %vm859, %v857, %v861
          %v864 = vpack.c.bf16 %v862, %v862
          %v865 = vpack.c.bf16 %v863, %v863
          %v866 = vld [vmem:[#allocation9] sm:$0xf]
          %v867 = vld [vmem:[#allocation9 + $0x4] sm:$0xf]
          %v868 = vld [vmem:[#allocation9 + $0x8] sm:$0xf]
          %v869 = vld [vmem:[#allocation9 + $0xc] sm:$0xf]
          %v870 = vld [vmem:[#allocation9 + $0x10] sm:$0xf]
          %v871 = vld [vmem:[#allocation9 + $0x14] sm:$0xf]
          %v872 = vld [vmem:[#allocation9 + $0x18] sm:$0xf]
          %v873 = vld [vmem:[#allocation9 + $0x1c] sm:$0xf]
          %v874 = vld [vmem:[#allocation9 + $0x20] sm:$0xf]
          %v875 = vld [vmem:[#allocation9 + $0x24] sm:$0xf]
          %v876 = vld [vmem:[#allocation9 + $0x28] sm:$0xf]
          %v877 = vld [vmem:[#allocation9 + $0x2c] sm:$0xf]
          %v878 = vld [vmem:[#allocation9 + $0x30] sm:$0xf]
          %v879 = vld [vmem:[#allocation9 + $0x34] sm:$0xf]
          %v880 = vld [vmem:[#allocation9 + $0x38] sm:$0xf]
          %v881 = vld [vmem:[#allocation9 + $0x3c] sm:$0xf]
          %v882 = vld [vmem:[#allocation9 + $0x40] sm:$0xf]
          %v883 = vld [vmem:[#allocation9 + $0x44] sm:$0xf]
          %v884 = vld [vmem:[#allocation9 + $0x48] sm:$0xf]
          %v885 = vld [vmem:[#allocation9 + $0x4c] sm:$0xf]
          %v886 = vld [vmem:[#allocation9 + $0x50] sm:$0xf]
          %v887 = vld [vmem:[#allocation9 + $0x54] sm:$0xf]
          %v888 = vld [vmem:[#allocation9 + $0x58] sm:$0xf]
          %v889 = vld [vmem:[#allocation9 + $0x5c] sm:$0xf]
          %v890 = vld [vmem:[#allocation9 + $0x60] sm:$0xf]
          %v891 = vld [vmem:[#allocation9 + $0x64] sm:$0xf]
          %v892 = vld [vmem:[#allocation9 + $0x68] sm:$0xf]
          %v893 = vld [vmem:[#allocation9 + $0x6c] sm:$0xf]
          %v894 = vld [vmem:[#allocation9 + $0x70] sm:$0xf]
          %v895 = vld [vmem:[#allocation9 + $0x74] sm:$0xf]
          %v896 = vld [vmem:[#allocation9 + $0x78] sm:$0xf]
          %v897 = vld [vmem:[#allocation9 + $0x7c] sm:$0xf]
          %v898 = vld [vmem:[%s4] sm:$0x1]
          %v900 = vperm.slane %v898, 0
          %v934 = vunpack.c.l.b16 %v866
          %v935 = vunpack.c.l.b16 %v867
          %v936 = vunpack.c.l.b16 %v868
          %v937 = vunpack.c.l.b16 %v869
          %v938 = vunpack.c.l.b16 %v870
          %v939 = vunpack.c.l.b16 %v871
          %v940 = vunpack.c.l.b16 %v872
          %v941 = vunpack.c.l.b16 %v873
          %v942 = vunpack.c.l.b16 %v874
          %v943 = vunpack.c.l.b16 %v875
          %v944 = vunpack.c.l.b16 %v876
          %v945 = vunpack.c.l.b16 %v877
          %v946 = vunpack.c.l.b16 %v878
          %v947 = vunpack.c.l.b16 %v879
          %v948 = vunpack.c.l.b16 %v880
          %v949 = vunpack.c.l.b16 %v881
          %v950 = vunpack.c.l.b16 %v882
          %v951 = vunpack.c.l.b16 %v883
          %v952 = vunpack.c.l.b16 %v884
          %v953 = vunpack.c.l.b16 %v885
          %v954 = vunpack.c.l.b16 %v886
          %v955 = vunpack.c.l.b16 %v887
          %v956 = vunpack.c.l.b16 %v888
          %v957 = vunpack.c.l.b16 %v889
          %v958 = vunpack.c.l.b16 %v890
          %v959 = vunpack.c.l.b16 %v891
          %v960 = vunpack.c.l.b16 %v892
          %v961 = vunpack.c.l.b16 %v893
          %v962 = vunpack.c.l.b16 %v894
          %v963 = vunpack.c.l.b16 %v895
          %v964 = vunpack.c.l.b16 %v896
          %v965 = vunpack.c.l.b16 %v897
          %v966 = vpack.c.b16 %v935, %v934
          %v967 = vpack.c.b16 %v937, %v936
          %v968 = vpack.c.b16 %v939, %v938
          %v969 = vpack.c.b16 %v941, %v940
          %v970 = vpack.c.b16 %v943, %v942
          %v971 = vpack.c.b16 %v945, %v944
          %v972 = vpack.c.b16 %v947, %v946
          %v973 = vpack.c.b16 %v949, %v948
          %v974 = vpack.c.b16 %v951, %v950
          %v975 = vpack.c.b16 %v953, %v952
          %v976 = vpack.c.b16 %v955, %v954
          %v977 = vpack.c.b16 %v957, %v956
          %v978 = vpack.c.b16 %v959, %v958
          %v979 = vpack.c.b16 %v961, %v960
          %v980 = vpack.c.b16 %v963, %v962
          %v981 = vpack.c.b16 %v965, %v964
          %998 = vmatpush.bf16.msra.mxu0 %v973
          %999 = vmatpush.bf16.msra.mxu0 %v972
          %1000 = vmatpush.bf16.msra.mxu0 %v971
          %1001 = vmatpush.bf16.msra.mxu0 %v970
          %1002 = vmatpush.bf16.msra.mxu0 %v969
          %1003 = vmatpush.bf16.msra.mxu0 %v968
          %1004 = vmatpush.bf16.msra.mxu0 %v967
          %1005 = vmatpush.bf16.msra.mxu0 %v966
          %1006 = vmatmul.bf16.gmra.mxu0 %v864
          %v1007 = vpop.f32.mrf.mxu0
          %v1008 = vadd.f32 %v900, %v1007
          %v1009 = vpop.f32.mrf.mxu0
          %1010 = vdwg.mxu0
          %1011 = vmatpush.bf16.msra.mxu0 %v981
          %1012 = vmatpush.bf16.msra.mxu0 %v980
          %1013 = vmatpush.bf16.msra.mxu0 %v979
          %1014 = vmatpush.bf16.msra.mxu0 %v978
          %1015 = vmatpush.bf16.msra.mxu0 %v977
          %1016 = vmatpush.bf16.msra.mxu0 %v976
          %1017 = vmatpush.bf16.msra.mxu0 %v975
          %1018 = vmatpush.bf16.msra.mxu0 %v974
          %1019 = vmatmul.bf16.gmra.mxu0 %v865
          %v1020 = vpop.f32.mrf.mxu0
          %v1021 = vadd.f32 %v1008, %v1020
          %v1022 = vpop.f32.mrf.mxu0
          %1023 = vdwg.mxu0
          %1024 = vst [vmem:[#allocation11] sm:$0xff] %v1021
        $region64: #{tpu_custom_call.1} parent=39 // pred_fallthru
          _
        // Predicated region
        $region65: #{tpu_custom_call.1} parent=39 // pred_check
          %p1025 = pneg %p171
        $region66: #{tpu_custom_call.1} parent=39 // pred_check_branch
          %1027 = sbr.rel (%p1025) target = $region68
        $region67: #{tpu_custom_call.1} parent=39 // pred_region
          %1029 = vsyncadd [#allocation5], 0
          %s1030 = smul.addr %s28, 8
          %s1031 = scalar_lea.hbm %s5, %s1030
          %s1033 = sshll.u32 [#allocation11], 4
          %s1034 = int_to_ptr.vmem [resolvable:$true] %s1033
          %s1035 = sshll.u32 %s1031, 4
          %s1036 = int_to_ptr.hbm [resolvable:$true] %s1035
          %1038 = dma.vmem_to_hbm [thread:$0]  %s1034, 128, %s1036, [#allocation5]
        $region68: #{tpu_custom_call.1} parent=39 // pred_fallthru
          _
        // Predicated region
        $region69: #{tpu_custom_call.1} parent=39 // pred_check
          %p1039 = pneg %p171
        $region70: #{tpu_custom_call.1} parent=39 // pred_check_branch
          %1041 = sbr.rel (%p1039) target = $region72
        $region71: #{tpu_custom_call.1} parent=39 // pred_region
          %1043 = dma.done [#allocation5], 128
        $region72: #{tpu_custom_call.1} parent=39 // pred_fallthru
          _
      $region40: #{tpu_custom_call.1} parent=5 // pred_fallthru
        _
      %p1044 = scmp.le.s32.totalorder 2, %s19
      // Predicated region
      $region73: #{tpu_custom_call.1} parent=5 // pred_check
        %p1045 = pneg %p1044
      $region74: #{tpu_custom_call.1} parent=5 // pred_check_branch
        %1047 = sbr.rel (%p1045) target = $region76
      $region75: #{tpu_custom_call.1} parent=5 // pred_region
        %s1048 = ssub.s32 %s19, 2
      $region76: #{tpu_custom_call.1} parent=5 // pred_fallthru
        _
    $region6: #{tpu_custom_call.1} parent=1 // loop_footer
      %s23 = sadd.s32 1, %s19
    $region7: #{tpu_custom_call.1} parent=1 // loop_footer_branch
      %18 = sbr.rel target = $region3
    $region8: #{tpu_custom_call.1} parent=1 // loop_exit
      _
    %1049 = vsyncpa [#allocation4], 1
    %s1050 = scalar_lea.sflag [#allocation4], 1
    %1051 = vsyncpa %s1050, 1
    %1052 = vsyncpa [#allocation7], 1
    %s1053 = scalar_lea.sflag [#allocation7], 1
    %1054 = vsyncpa %s1053, 1
    %1055 = vsyncpa [#allocation10], 1
    %1056 = vsyncpa [#allocation5], 1
    %s1057 = scalar_lea.sflag [#allocation5], 1
    %1058 = vsyncpa %s1057, 1

</llo_original>
